<compile_context>
chip_gen: v7x
topology: tpu7x:2x2x1
jax: 0.10.0
libtpu: 0.0.40
codegen_flags: <defaults>
</compile_context>

<pallas_src>
import typing as tp
from functools import partial

import numpy as np
import jax
import jax.numpy as jnp
from jax.experimental import pallas as pl
from jax.experimental.pallas import tpu as pltpu


# ----------------------------------------------------------------------------
# Helpers
# ----------------------------------------------------------------------------
def _round_up(x: int, m: int) -> int:
    return ((x + m - 1) // m) * m


def _vmem_budget_and_cap() -> tp.Tuple[int, int]:
    """Generation-aware (tiling budget, scoped vmem_limit cap) in bytes."""
    try:
        cap_bytes = int(pltpu.get_tpu_info().vmem_capacity_bytes)
    except Exception:
        cap_bytes = 64 << 20                      # conservative: v7x per-TC VMEM
    if cap_bytes <= (64 << 20):                   # v7x (64 MiB per TensorCore)
        return 20 << 20, 48 << 20
    return 44 << 20, 100 << 20                    # v5e / v6e (128 MiB)


def _choose_tiles(m_rows: int, d_pad: int, o_pad: int,
                  budget_bytes: int) -> tp.Tuple[int, int]:
    """Pick (TM, TO): row tile and output-dim tile.

    - TO = O_pad when the bf16 weight slab fits the budget, else tiled in
      multiples of 128 so the working set stays inside VMEM on all generations.
    - TM sized from the *remaining* budget (resident W/b counted once),
      preferring multiples of 128, capped at 512, and capped so the M grid has
      >= 4 steps when M >= 256 (megacore + pipeline overlap).
    """
    to = o_pad
    while to > 128 and 2 * d_pad * to > int(0.6 * budget_bytes):
        to = max(128, ((to // 2) // 128) * 128)

    w_bufs = 1 if to == o_pad else 2              # single-buffered when invariant
    resident = w_bufs * (2 * d_pad * to) + 4 * to  # bf16 W + f32 bias
    avail = max(budget_bytes - resident, 1 << 20)
    per_row = 2 * (2 * d_pad + 4 * to)            # double-buffered x(bf16)+out(f32)
    tm_mem = max(8, int(avail // per_row) // 8 * 8)

    if m_rows >= 256:
        tm_split = _round_up(pl.cdiv(m_rows, 4), 128)
    else:
        tm_split = _round_up(max(m_rows, 8), 8)

    tm = min(512, tm_mem, tm_split)
    tm = (tm // 128) * 128 if tm >= 128 else max(8, (tm // 8) * 8)
    return tm, to


def _block_spec(shape, index_map, *, single_buffer: bool = False) -> pl.BlockSpec:
    """BlockSpec; single-buffered (Buffered(1)) when the operand is invariant."""
    if single_buffer and hasattr(pl, "Buffered"):
        try:
            return pl.BlockSpec(shape, index_map, pipeline_mode=pl.Buffered(1))
        except TypeError:
            pass
    return pl.BlockSpec(shape, index_map)


# ----------------------------------------------------------------------------
# Pallas kernel: y = x @ Wt + b   (Wt pre-transposed, bf16; f32 accumulate)
# ----------------------------------------------------------------------------
def _linear_kernel(x_ref, wt_ref, b_ref, o_ref):
    # x_ref : [TM, D_pad]  bf16 row tile (streams over the M grid axis)
    # wt_ref: [D_pad, TO]  bf16 weight tile (resident when TO == O_pad)
    # b_ref : [1, TO]      f32 bias tile
    # o_ref : [TM, TO]     f32 output tile
    acc = jnp.dot(x_ref[...], wt_ref[...], preferred_element_type=jnp.float32)
    o_ref[...] = (acc + b_ref[...]).astype(o_ref.dtype)


def pallas_linear(x: jax.Array, wt: jax.Array, b: jax.Array, *,
                  tm: int, to: int, vmem_limit: int,
                  out_dtype=jnp.float32) -> jax.Array:
    """x: [M, Dp] bf16, wt: [Dp, Op] bf16, b: [1, Op] f32 -> [M, Op] out_dtype."""
    M, Dp = x.shape
    Op = wt.shape[1]
    n_i = pl.cdiv(M, tm)          # ragged last row tile handled by Pallas
    n_j = pl.cdiv(Op, to)
    w_invariant = (n_j == 1)      # constant index_map -> single-buffer W and b

    return pl.pallas_call(
        _linear_kernel,
        out_shape=jax.ShapeDtypeStruct((M, Op), out_dtype),
        grid_spec=pltpu.PrefetchScalarGridSpec(
            num_scalar_prefetch=0,
            grid=(n_j, n_i),      # i (rows) innermost -> W stays put per j sweep
            in_specs=[
                pl.BlockSpec((tm, Dp), lambda j, i: (i, 0)),   # x: streams row tiles
                _block_spec((Dp, to), lambda j, i: (0, j),
                            single_buffer=w_invariant),        # W tile
                _block_spec((1, to), lambda j, i: (0, j),
                            single_buffer=w_invariant),        # bias tile
            ],
            out_specs=pl.BlockSpec((tm, to), lambda j, i: (i, j)),
        ),
        compiler_params=pltpu.CompilerParams(
            dimension_semantics=("parallel", "parallel"),  # shard across v7x's 2 TCs
            vmem_limit_bytes=vmem_limit,
        ),
    )(x, wt, b)


@partial(jax.jit, static_argnames=("output_dim", "use_pallas"))
def _project_flat(x_flat: jax.Array, wt_pad: jax.Array, b_pad: jax.Array,
                  *, output_dim: int, use_pallas: bool) -> jax.Array:
    """[M, D] @ Linear -> [M, output_dim]; pad/cast/slice fused in this jit region."""
    M, D = x_flat.shape
    Dp, Op = wt_pad.shape

    if not use_pallas:
        # Tiny problems: XLA-fused dot beats pad -> kernel launch -> slice.
        y = jnp.dot(x_flat.astype(jnp.bfloat16), wt_pad[:D, :output_dim],
                    preferred_element_type=jnp.float32)
        return y + b_pad[:, :output_dim]

    budget, cap = _vmem_budget_and_cap()
    tm, to = _choose_tiles(M, Dp, Op, budget)

    # Lane (K) padding only; rows stream ragged via grid = cdiv(M, tm).
    xp = jnp.pad(x_flat, ((0, 0), (0, Dp - D))).astype(jnp.bfloat16)

    w_bufs = 1 if to == Op else 2
    est = (w_bufs * 2 * Dp * to + 4 * to
           + 2 * (2 * tm * Dp + 4 * tm * to))        # streamed x + out, double-buffered
    vmem_limit = int(min(max(2 * est, 32 << 20), cap))

    y = pallas_linear(xp, wt_pad, b_pad, tm=tm, to=to, vmem_limit=vmem_limit)
    return y[:, :output_dim]


# ----------------------------------------------------------------------------
# Conditioner (base) and a concrete embedding conditioner
# ----------------------------------------------------------------------------
class Conditioner:
    def __init__(self, dim: int, output_dim: int, cond_len: int,
                 project_out: bool = False, *, seed: int = 0,
                 force_pallas: bool = False):
        self.dim = dim
        self.output_dim = output_dim
        self.cond_len = cond_len
        self.has_proj = (dim != output_dim) or project_out
        self.force_pallas = force_pallas

        if self.has_proj:
            # nn.Linear-shaped init: weight [output_dim, dim], bias [output_dim]
            kw, kb = jax.random.split(jax.random.PRNGKey(seed))
            bound = 1.0 / (dim ** 0.5)
            w = jax.random.uniform(kw, (output_dim, dim), jnp.float32, -bound, bound)
            bias = jax.random.uniform(kb, (output_dim,), jnp.float32, -bound, bound)
            self.proj_w = w            # torch layout, kept for reference checks
            self.proj_b = bias

            # Hoisted one-time layout work: transpose to [D, O], zero-pad both
            # feature axes to lane width (128), cast weight to bf16 (MXU-native).
            d_pad = _round_up(dim, 128)
            o_pad = _round_up(output_dim, 128)
            wt = jnp.zeros((d_pad, o_pad), jnp.float32).at[:dim, :output_dim].set(w.T)
            self.proj_wt_padded = wt.astype(jnp.bfloat16)
            self.proj_b_padded = (jnp.zeros((1, o_pad), jnp.float32)
                                  .at[0, :output_dim].set(bias))
        else:
            self.proj_w = None
            self.proj_b = None
            self.proj_wt_padded = None
            self.proj_b_padded = None

    def _project(self, x: jax.Array) -> jax.Array:
        # x: [B, cond_len, dim] -> [B, cond_len, output_dim]
        if not self.has_proj:
            return x  # nn.Identity
        B, L, D = x.shape
        # Launch heuristic: a Pallas call only pays off above ~4M padded MACs.
        macs = B * L * _round_up(D, 128) * _round_up(self.output_dim, 128)
        use_pallas = bool(self.force_pallas or macs >= (1 << 22))
        y = _project_flat(x.reshape(B * L, D), self.proj_wt_padded,
                          self.proj_b_padded, output_dim=self.output_dim,
                          use_pallas=use_pallas)
        return y.reshape(B, L, self.output_dim)

    def __call__(self, x: tp.Any, device: tp.Any) -> tp.Any:
        raise NotImplementedError()


class EmbeddingConditioner(Conditioner):
    """Stacks per-item [cond_len, dim] embeddings and applies proj_out."""

    def __call__(self, conditioner_inputs: tp.List[tp.Any], device: tp.Any):
        # Stage host-side inputs with a single transfer when possible.
        if all(isinstance(e, np.ndarray) for e in conditioner_inputs):
            x = jnp.asarray(np.stack(conditioner_inputs, axis=0), jnp.float32)
        else:
            x = jnp.stack([jnp.asarray(e, jnp.float32) for e in conditioner_inputs],
                          axis=0)                  # [B, cond_len, dim]
        cond = self._project(x)                    # [B, cond_len, output_dim]
        mask = jnp.ones(cond.shape[:2], dtype=jnp.bool_)
        return (cond, mask)


# ----------------------------------------------------------------------------
# MultiConditioner — dictionary dispatch (glue), per-key Pallas projection
# ----------------------------------------------------------------------------
class MultiConditioner:
    def __init__(self, conditioners: tp.Dict[str, Conditioner],
                 default_keys: tp.Dict[str, str] = {}):
        self.conditioners = conditioners
        self.default_keys = default_keys

    # TODO(synk): conditioners whose padded (D, O) match could be fused into a
    # single pallas_call (concatenate row slabs, select the weight via scalar
    # prefetch in the W index_map) to amortize per-call launch/DMA-ramp cost.
    def __call__(self, batch_metadata: tp.List[tp.Dict[str, tp.Any]],
                 device: tp.Any) -> tp.Dict[str, tp.Any]:
        output = {}
        for key, conditioner in self.conditioners.items():
            condition_key = key
            conditioner_inputs = []
            for x in batch_metadata:
                if condition_key not in x:
                    if condition_key in self.default_keys:
                        condition_key = self.default_keys[condition_key]
                    else:
                        raise ValueError(
                            f"Conditioner key {condition_key} not found in batch metadata")
                v = x[condition_key]
                # Mirrors the original PyTorch behavior exactly: any list is
                # unwrapped to its first element; tuples only when length-1.
                if isinstance(v, list) or (isinstance(v, tuple) and len(v) == 1):
                    conditioner_inputs.append(v[0])
                else:
                    conditioner_inputs.append(v)
            output[key] = conditioner(conditioner_inputs, device)
        return output


# ----------------------------------------------------------------------------
# Demo
# ----------------------------------------------------------------------------
if __name__ == "__main__":
    key = jax.random.PRNGKey(0)

    B = 2            # batch (len(batch_metadata))
    COND_LEN = 8     # sequence length of conditioning
    DIM = 32         # conditioner embedding dim
    OUT_DIM = 64     # projected output dim

    # "prompt": dim != output_dim -> Pallas Linear path (forced at demo size).
    # "style":  dim == output_dim, project_out=False -> Identity path.
    conditioners = {
        "prompt": EmbeddingConditioner(DIM, OUT_DIM, COND_LEN,
                                       project_out=False, seed=1,
                                       force_pallas=True),
        "style":  EmbeddingConditioner(OUT_DIM, OUT_DIM, COND_LEN,
                                       project_out=False, seed=2),
    }
    # "style" falls back to "style_raw" via default_keys.
    multi = MultiConditioner(conditioners, default_keys={"style": "style_raw"})

    k1, k2, k3, k4 = jax.random.split(key, 4)
    batch_metadata = [
        {
            "prompt": [jax.random.normal(k1, (COND_LEN, DIM), jnp.float32)],
            "style_raw": jax.random.normal(k2, (COND_LEN, OUT_DIM), jnp.float32),
        },
        {
            "prompt": jax.random.normal(k3, (COND_LEN, DIM), jnp.float32),
            "style_raw": jax.random.normal(k4, (COND_LEN, OUT_DIM), jnp.float32),
        },
    ]

    out = multi(batch_metadata, device="tpu")

    prompt_cond, prompt_mask = out["prompt"]
    style_cond, style_mask = out["style"]
    jax.block_until_ready(prompt_cond)
    jax.block_until_ready(style_cond)

    # Sanity checks: shapes and numerics vs plain-JAX f32 reference.
    assert prompt_cond.shape == (B, COND_LEN, OUT_DIM), prompt_cond.shape
    assert style_cond.shape == (B, COND_LEN, OUT_DIM), style_cond.shape
    assert prompt_mask.shape == (B, COND_LEN)
    assert style_mask.shape == (B, COND_LEN)

    c = conditioners["prompt"]
    x_ref = jnp.stack([jnp.asarray(batch_metadata[0]["prompt"][0]),
                       jnp.asarray(batch_metadata[1]["prompt"])], axis=0)
    ref = jnp.einsum("bld,od->blo", x_ref, c.proj_w) + c.proj_b
    # bf16 operands on the MXU -> compare with a relative-error tolerance.
    rel_err = jnp.linalg.norm(prompt_cond - ref) / jnp.linalg.norm(ref)
    assert float(rel_err) < 2e-2, float(rel_err)

    # Identity conditioner must pass its input through unchanged.
    style_ref = jnp.stack([jnp.asarray(batch_metadata[0]["style_raw"]),
                           jnp.asarray(batch_metadata[1]["style_raw"])], axis=0)
    assert jnp.allclose(style_cond, style_ref)

    print("KERNEL_OK")
</pallas_src>

<mosaic_0001>
module attributes {stable_mosaic.version = 11 : i64} {
  func.func @_linear_kernel(%arg0: i32, %arg1: i32, %arg2: memref<16x128xbf16, #tpu.memory_space<vmem>>, %arg3: memref<128x128xbf16, #tpu.memory_space<vmem>>, %arg4: memref<1x128xf32, #tpu.memory_space<vmem>>, %arg5: memref<16x128xf32, #tpu.memory_space<vmem>>) attributes {dimension_semantics = [#tpu.dimension_semantics<parallel>, #tpu.dimension_semantics<parallel>], iteration_bounds = array<i64: 1, 1>, scalar_prefetch = 0 : i64, scratch_operands = 0 : i64, tpu.core_type = #tpu.core_type<tc>, window_params = [{transform_indices = @transform_0, window_bounds = array<i64: 16, 128>}, {pipeline_mode = #tpu.pipeline_mode<synchronous>, transform_indices = @transform_1, window_bounds = array<i64: 128, 128>}, {pipeline_mode = #tpu.pipeline_mode<synchronous>, transform_indices = @transform_2, window_bounds = array<i64: 1, 128>}, {transform_indices = @transform_3, window_bounds = array<i64: 16, 128>}]} {
    %c0 = arith.constant 0 : index
    %c0_0 = arith.constant 0 : index
    %0 = vector.load %arg2[%c0, %c0_0] : memref<16x128xbf16, #tpu.memory_space<vmem>>, vector<16x128xbf16>
    %c0_1 = arith.constant 0 : index
    %c0_2 = arith.constant 0 : index
    %1 = vector.load %arg3[%c0_1, %c0_2] : memref<128x128xbf16, #tpu.memory_space<vmem>>, vector<128x128xbf16>
    %cst = arith.constant dense<0.000000e+00> : vector<16x128xf32>
    %2 = tpu.matmul %0, %1, %cst {dimension_numbers = #tpu.dot_dimension_numbers<[1], [0], [0], [1], [0, 0, 1, 1], [], []>} : vector<16x128xbf16>, vector<128x128xbf16>, vector<16x128xf32> -> vector<16x128xf32>
    %c0_3 = arith.constant 0 : index
    %c0_4 = arith.constant 0 : index
    %3 = vector.load %arg4[%c0_3, %c0_4] : memref<1x128xf32, #tpu.memory_space<vmem>>, vector<1x128xf32>
    %4 = vector.broadcast %3 : vector<1x128xf32> to vector<16x128xf32>
    %5 = arith.addf %2, %4 : vector<16x128xf32>
    %c0_5 = arith.constant 0 : index
    %c0_6 = arith.constant 0 : index
    %6 = vector.load %arg5[%c0_5, %c0_6] : memref<16x128xf32, #tpu.memory_space<vmem>>, vector<16x128xf32>
    tpu.vector_store %arg5[%c0_5, %c0_6], %5 {strides = array<i32>} : memref<16x128xf32, #tpu.memory_space<vmem>>, vector<16x128xf32>,
    return
  }
  func.func @transform_0(%arg0: i32, %arg1: i32) -> (i32, i32) {
    %c0_i32 = arith.constant 0 : i32
    %c0_i32_0 = arith.constant 0 : i32
    return %arg1, %c0_i32 : i32, i32
  }
  func.func @transform_1(%arg0: i32, %arg1: i32) -> (i32, i32) {
    %c0_i32 = arith.constant 0 : i32
    %c0_i32_0 = arith.constant 0 : i32
    return %c0_i32, %arg0 : i32, i32
  }
  func.func @transform_2(%arg0: i32, %arg1: i32) -> (i32, i32) {
    %c0_i32 = arith.constant 0 : i32
    %c0_i32_0 = arith.constant 0 : i32
    return %c0_i32, %arg0 : i32, i32
  }
  func.func @transform_3(%arg0: i32, %arg1: i32) -> (i32, i32) {
    %c0_i32 = arith.constant 0 : i32
    return %arg1, %arg0 : i32, i32
  }
}

</mosaic_0001>

<llo_original>
// kernel: _project_flat.1
$region0: #{_project_flat.1}
  #allocation0 [shape = 'u32[]', space=smem, size = 0x4, offset = 0x4, fixed_abs, tag = 'smem constant byte address 0x4 - core index']
  #allocation1 [shape = 'u32[144,128]{1,0:T(1,128)}', space=vmem, size = 0x12000, scoped, tag = 'internal scratch']
  %s0 = inlined_call_operand.vmem [shape: bf16[16,128], index: 0, kind: input, shape index: {}]
  %s1 = inlined_call_operand.hbm [shape: bf16[128,128], index: 1, kind: input, shape index: {}]
  %s2 = inlined_call_operand.vmem [shape: f32[1,128], index: 2, kind: input, shape index: {}]
  %s3 = inlined_call_operand.hbm [shape: f32[16,128], index: 3, kind: output, shape index: {}]
  %s4 = sld [smem:[#allocation0]]
  $region26: #{_project_flat.1} parent=0
    _
  %s6 = ssub.s32 1, %s4
  %s7 = scalar_select 0, %s6, %s4
  $region1: #{_project_flat.1} parent=0
    #allocation2 [shape = 'u8[32768]{0}', space=vmem, size = 0x8000, scoped, tag = 'input window, operand 1, single buffered']
    #allocation3 [shape = 's32[1]{0}', space=sflag, size = 0x4, scoped, tag = 'scoped memory for _project_flat.1']
    #allocation4 [shape = 's32[1]{0}', space=sflag, size = 0x4, scoped, tag = 'scoped memory for _project_flat.1']
    #allocation5 [shape = 'u8[8192]{0}', space=vmem, size = 0x2000, scoped, tag = 'output window, operand 0, single buffered']
    %8 = vsyncpa [#allocation3], 0
    %9 = vsyncpa [#allocation4], 0
    // Predicated region
    $region2: #{_project_flat.1} parent=1 // pred_check
      _
    $region3: #{_project_flat.1} parent=1 // pred_check_branch
      %11 = sbr.rel (0) target = $region5
    $region4: #{_project_flat.1} parent=1 // pred_region
      _
    $region5: #{_project_flat.1} parent=1 // pred_fallthru
      _
    // Predicated region
    $region6: #{_project_flat.1} parent=1 // pred_check
      _
    $region7: #{_project_flat.1} parent=1 // pred_check_branch
      %13 = sbr.rel (0) target = $region9
    $region8: #{_project_flat.1} parent=1 // pred_region
      %s15 = ssub.s32 1024, 1024
      %16 = vsyncadd [#allocation3], %s15
      %s17 = sshll.u32 [#allocation2], 4
      %s18 = int_to_ptr.vmem [resolvable:$true] %s17
      %23 = dma.hbm_to_vmem [thread:$0]  %s1, 1024, %s18, [#allocation3], 64, 64, 4
    $region9: #{_project_flat.1} parent=1 // pred_fallthru
      _
    // Predicated region
    $region10: #{_project_flat.1} parent=1 // pred_check
      _
    $region11: #{_project_flat.1} parent=1 // pred_check_branch
      %25 = sbr.rel (0) target = $region13
    $region12: #{_project_flat.1} parent=1 // pred_region
      _
    $region13: #{_project_flat.1} parent=1 // pred_fallthru
      _
    // Predicated region
    $region14: #{_project_flat.1} parent=1 // pred_check
      _
    $region15: #{_project_flat.1} parent=1 // pred_check_branch
      %27 = sbr.rel (0) target = $region17
    $region16: #{_project_flat.1} parent=1 // pred_region
      %28 = dma.done [#allocation3], 1024
    $region17: #{_project_flat.1} parent=1 // pred_fallthru
      _
    %v30 = vld [vmem:[%s0] sm:$0xf]
    %v31 = vld [vmem:[%s0 + $0x4] sm:$0xf]
    %v32 = vld [vmem:[#allocation2] sm:$0xf]
    %v33 = vld [vmem:[#allocation2 + $0x4] sm:$0xf]
    %v34 = vld [vmem:[#allocation2 + $0x8] sm:$0xf]
    %v35 = vld [vmem:[#allocation2 + $0xc] sm:$0xf]
    %v36 = vld [vmem:[#allocation2 + $0x10] sm:$0xf]
    %v37 = vld [vmem:[#allocation2 + $0x14] sm:$0xf]
    %v38 = vld [vmem:[#allocation2 + $0x18] sm:$0xf]
    %v39 = vld [vmem:[#allocation2 + $0x1c] sm:$0xf]
    %v40 = vld [vmem:[#allocation2 + $0x20] sm:$0xf]
    %v41 = vld [vmem:[#allocation2 + $0x24] sm:$0xf]
    %v42 = vld [vmem:[#allocation2 + $0x28] sm:$0xf]
    %v43 = vld [vmem:[#allocation2 + $0x2c] sm:$0xf]
    %v44 = vld [vmem:[#allocation2 + $0x30] sm:$0xf]
    %v45 = vld [vmem:[#allocation2 + $0x34] sm:$0xf]
    %v46 = vld [vmem:[#allocation2 + $0x38] sm:$0xf]
    %v47 = vld [vmem:[#allocation2 + $0x3c] sm:$0xf]
    %v48 = vld [vmem:[%s2] sm:$0x1]
    %v50 = vlaneseq
    %v51 = vshrl.u32 %v50, 7
    %v52 = vsub.s32 0, %v51
    %v53 = vrot.slane %v48, %v52
    %v57 = vunpack.c.l.b16 %v30
    %v58 = vunpack.c.l.b16 %v31
    %v59 = vpack.c.b16 %v58, %v57
    %v77 = vunpack.c.l.b16 %v32
    %v78 = vunpack.c.l.b16 %v33
    %v79 = vunpack.c.l.b16 %v34
    %v80 = vunpack.c.l.b16 %v35
    %v81 = vunpack.c.l.b16 %v36
    %v82 = vunpack.c.l.b16 %v37
    %v83 = vunpack.c.l.b16 %v38
    %v84 = vunpack.c.l.b16 %v39
    %v85 = vunpack.c.l.b16 %v40
    %v86 = vunpack.c.l.b16 %v41
    %v87 = vunpack.c.l.b16 %v42
    %v88 = vunpack.c.l.b16 %v43
    %v89 = vunpack.c.l.b16 %v44
    %v90 = vunpack.c.l.b16 %v45
    %v91 = vunpack.c.l.b16 %v46
    %v92 = vunpack.c.l.b16 %v47
    %v93 = vpack.c.b16 %v78, %v77
    %v94 = vpack.c.b16 %v80, %v79
    %v95 = vpack.c.b16 %v82, %v81
    %v96 = vpack.c.b16 %v84, %v83
    %v97 = vpack.c.b16 %v86, %v85
    %v98 = vpack.c.b16 %v88, %v87
    %v99 = vpack.c.b16 %v90, %v89
    %v100 = vpack.c.b16 %v92, %v91
    %109 = vmatprep.subr.bf16.mxu0 0
    %110 = vmatpush1.bf16.msra.mxu0 %v93
    %111 = vmatprep.subr.bf16.mxu0 0
    %112 = vmatpush1.bf16.msra.mxu0 %v94
    %113 = vmatprep.subr.bf16.mxu0 0
    %114 = vmatpush1.bf16.msra.mxu0 %v95
    %115 = vmatprep.subr.bf16.mxu0 0
    %116 = vmatpush1.bf16.msra.mxu0 %v96
    %117 = vmatprep.subr.bf16.mxu0 0
    %118 = vmatpush1.bf16.msra.mxu0 %v97
    %119 = vmatprep.subr.bf16.mxu0 0
    %120 = vmatpush1.bf16.msra.mxu0 %v98
    %121 = vmatprep.subr.bf16.mxu0 0
    %122 = vmatpush1.bf16.msra.mxu0 %v99
    %123 = vmatprep.subr.bf16.mxu0 0
    %124 = vmatpush1.bf16.msra.mxu0 %v100
    %125 = vmatprep.subr.bf16.mxu0 0
    %126 = vmatpush1.bf16.msra.mxu0 0
    %127 = vmatprep.subr.bf16.mxu0 0
    %128 = vmatpush1.bf16.msra.mxu0 0
    %129 = vmatprep.subr.bf16.mxu0 0
    %130 = vmatpush1.bf16.msra.mxu0 0
    %131 = vmatprep.subr.bf16.mxu0 0
    %132 = vmatpush1.bf16.msra.mxu0 0
    %133 = vmatprep.subr.bf16.mxu0 0
    %134 = vmatpush1.bf16.msra.mxu0 0
    %135 = vmatprep.subr.bf16.mxu0 0
    %136 = vmatpush1.bf16.msra.mxu0 0
    %137 = vmatprep.subr.bf16.mxu0 0
    %138 = vmatpush1.bf16.msra.mxu0 0
    %139 = vmatprep.subr.bf16.mxu0 0
    %140 = vmatpush1.bf16.msra.mxu0 0
    %141 = vmatprep.mubr.bf16.mxu0 0
    %142 = vmatmul.mubr.bf16.gmra.mrb[0].mxu0 %v59
    %v143 = vpop.f32.mrb[0].mxu0
    %v144 = vadd.f32 %v53, %v143
    %v145 = vpop.f32.mrb[0].mxu0
    %v146 = vpop.f32.mrb[0].mxu0
    %v147 = vadd.f32 %v53, %v146
    %v148 = vpop.f32.mrb[0].mxu0
    %149 = vdwg.mxu0
    %150 = vst [vmem:[#allocation5] sm:$0xff] %v144
    %151 = vst [vmem:[#allocation5 + $0x8] sm:$0xff] %v147
    // Predicated region
    $region18: #{_project_flat.1} parent=1 // pred_check
      _
    $region19: #{_project_flat.1} parent=1 // pred_check_branch
      %153 = sbr.rel (0) target = $region21
    $region20: #{_project_flat.1} parent=1 // pred_region
      %s155 = ssub.s32 256, 256
      %156 = vsyncadd [#allocation4], %s155
      %s157 = sshll.u32 [#allocation5], 4
      %s158 = int_to_ptr.vmem [resolvable:$true] %s157
      %163 = dma.vmem_to_hbm [thread:$0]  %s158, 256, %s3, [#allocation4], 128, 128, 8
    $region21: #{_project_flat.1} parent=1 // pred_fallthru
      _
    // Predicated region
    $region22: #{_project_flat.1} parent=1 // pred_check
      _
    $region23: #{_project_flat.1} parent=1 // pred_check_branch
      %165 = sbr.rel (0) target = $region25
    $region24: #{_project_flat.1} parent=1 // pred_region
      %166 = dma.done [#allocation4], 256
    $region25: #{_project_flat.1} parent=1 // pred_fallthru
      _
    %167 = vsyncpa [#allocation3], 1
    %168 = vsyncpa [#allocation4], 1

</llo_original>
